<compile_context>
chip_gen: v7x
topology: tpu7x:2x2x1
jax: 0.10.0
libtpu: 0.0.40
codegen_flags: <defaults>
</compile_context>

<pallas_src>
import functools
import math

import jax
import jax.numpy as jnp
from jax import lax
from jax.experimental import pallas as pl
from jax.experimental.pallas import tpu as pltpu


# ----------------------------------------------------------------------------
# Parameter / buffer setup (plain JAX glue, deterministic)
# ----------------------------------------------------------------------------
def make_positional_encoding_buffer(d_model: int, max_len: int = 5000) -> jnp.ndarray:
    """Reproduces the PyTorch __init__ buffer `pe` of shape [max_len, 1, d_model]."""
    position = jnp.arange(max_len, dtype=jnp.float32)[:, None]                  # (L, 1)
    div_term = jnp.exp(
        jnp.arange(0, d_model, 2, dtype=jnp.float32) * (-math.log(10000.0) / d_model)
    )                                                                           # (D/2,)
    angles = position * div_term                                                # (L, D/2)
    pe = jnp.zeros((max_len, d_model), dtype=jnp.float32)
    pe = pe.at[:, 0::2].set(jnp.sin(angles))
    pe = pe.at[:, 1::2].set(jnp.cos(angles))
    return pe[:, None, :]                                                       # (L, 1, D)


# ----------------------------------------------------------------------------
# Pallas kernel: y = dropout(x + pe[:seq_len])
# ----------------------------------------------------------------------------
def _pe_add_dropout_kernel(seed_ref, x_ref, pe_ref, o_ref, *,
                           p: float, training: bool, tile_s: int):
    # x_ref: (TS, B, D) VMEM tile; pe_ref: (TS, 1, D) VMEM tile.
    y = x_ref[...] + pe_ref[...]            # broadcast over batch (sublane dim)

    if training and p > 0.0:
        # Inverted dropout with a stateless element-indexed hash PRNG.
        # (Mask pattern necessarily differs from PyTorch's RNG stream.)
        shape = y.shape
        s_idx = (lax.broadcasted_iota(jnp.int32, shape, 0)
                 + pl.program_id(0) * tile_s).astype(jnp.uint32)   # global seq pos
        b_idx = lax.broadcasted_iota(jnp.int32, shape, 1).astype(jnp.uint32)
        d_idx = lax.broadcasted_iota(jnp.int32, shape, 2).astype(jnp.uint32)
        seed_u = (seed_ref[0] & jnp.int32(0x7FFFFFFF)).astype(jnp.uint32)

        h = (s_idx * jnp.uint32(0x9E3779B1)
             ^ b_idx * jnp.uint32(0x85EBCA77)
             ^ d_idx * jnp.uint32(0xC2B2AE3D)
             ^ seed_u * jnp.uint32(0x27D4EB2F))
        # murmur3 fmix32 finalizer (pure VPU: mul / xor / shift)
        h = h ^ (h >> jnp.uint32(16))
        h = h * jnp.uint32(0x85EBCA6B)
        h = h ^ (h >> jnp.uint32(13))
        h = h * jnp.uint32(0xC2B2AE35)
        h = h ^ (h >> jnp.uint32(16))

        threshold = jnp.uint32(min(int(p * (2.0 ** 32)), 2 ** 32 - 1))
        keep = h >= threshold                                   # P(keep) = 1 - p
        keep_scale = jnp.asarray(1.0 / (1.0 - p), dtype=y.dtype)
        y = jnp.where(keep, y * keep_scale, jnp.zeros_like(y))

    o_ref[...] = y.astype(o_ref.dtype)


def _choose_seq_tile(S: int, B: int, D: int, itemsize: int,
                     budget_bytes: int = 10 * 1024 * 1024) -> int:
    """Largest seq-tile whose double-buffered x/y/pe blocks fit `budget_bytes`.

    Per tile-row bytes: 2*(B*D) [x] + 2*(B*D) [y] + 2*D [pe], all * itemsize.
    Budget is kept under v5e's 16 MiB scoped-VMEM default (tightest of
    v5e/v6e/v7x), leaving headroom for compiler scratch.
    """
    bytes_per_row = itemsize * D * (4 * B + 2)
    ts = max(1, budget_bytes // max(1, bytes_per_row))
    if ts >= 8:
        ts = (ts // 8) * 8                  # tidy multiple of the sublane count
    return int(min(S, ts))


def positional_encoding_forward(x, pe, *, p: float = 0.1, training: bool = False,
                                seed: int = 0):
    """x: [S, B, D]; pe: [max_len, 1, D] -> [S, B, D] (same dtype as x)."""
    S, B, D = x.shape
    pe_slice = lax.slice_in_dim(pe, 0, S, axis=0).astype(x.dtype)   # (S, 1, D)
    seed_arr = jnp.array([seed], dtype=jnp.int32)

    ts = _choose_seq_tile(S, B, D, jnp.dtype(x.dtype).itemsize)
    grid = (pl.cdiv(S, ts),)

    kernel = functools.partial(_pe_add_dropout_kernel,
                               p=float(p), training=bool(training), tile_s=ts)

    return pl.pallas_call(
        kernel,
        out_shape=jax.ShapeDtypeStruct((S, B, D), x.dtype),
        grid_spec=pltpu.PrefetchScalarGridSpec(
            num_scalar_prefetch=1,          # seed lands in SMEM
            grid=grid,
            in_specs=[
                pl.BlockSpec((ts, B, D), lambda i, seed_ref: (i, 0, 0)),
                pl.BlockSpec((ts, 1, D), lambda i, seed_ref: (i, 0, 0)),
            ],
            out_specs=pl.BlockSpec((ts, B, D), lambda i, seed_ref: (i, 0, 0)),
        ),
        compiler_params=pltpu.CompilerParams(
            # seq-tile axis is embarrassingly parallel -> shard across v7x's 2 TCs
            dimension_semantics=("parallel",),
        ),
    )(seed_arr, x, pe_slice)


# ----------------------------------------------------------------------------
# Demo / self-check
# ----------------------------------------------------------------------------
if __name__ == "__main__":
    d_model = 32
    max_len = 64
    seq_len = 8
    batch = 2
    p = 0.1

    key = jax.random.PRNGKey(0)
    x = jax.random.normal(key, (seq_len, batch, d_model), dtype=jnp.float32)
    pe = make_positional_encoding_buffer(d_model, max_len)

    # Eval-mode forward (dropout is identity) — must match x + pe[:S].
    y_eval = positional_encoding_forward(x, pe, p=p, training=False)
    y_eval = jax.block_until_ready(y_eval)

    y_ref = x + pe[:seq_len]              # pure-JAX reference
    assert y_eval.shape == (seq_len, batch, d_model)
    assert jnp.allclose(y_eval, y_ref, atol=1e-6, rtol=1e-6), "eval-mode mismatch"

    # Training-mode forward (inverted dropout via stateless hash PRNG).
    y_train = positional_encoding_forward(x, pe, p=p, training=True, seed=1234)
    y_train = jax.block_until_ready(y_train)
    assert y_train.shape == (seq_len, batch, d_model)
    assert bool(jnp.all(jnp.isfinite(y_train)))
    # Every surviving element equals (x+pe)/(1-p); dropped ones are exactly 0.
    scaled = y_ref / (1.0 - p)
    ok = jnp.logical_or(jnp.isclose(y_train, 0.0),
                        jnp.isclose(y_train, scaled, atol=1e-5, rtol=1e-5))
    assert bool(jnp.all(ok)), "training-mode dropout semantics mismatch"

    print("KERNEL_OK")
</pallas_src>

<mosaic_0001>
module attributes {stable_mosaic.version = 11 : i64} {
  func.func @_pe_add_dropout_kernel(%arg0: i32, %arg1: memref<1xi32, #tpu.memory_space<smem>>, %arg2: memref<8x2x32xf32, #tpu.memory_space<vmem>>, %arg3: memref<8x1x32xf32, #tpu.memory_space<vmem>>, %arg4: memref<8x2x32xf32, #tpu.memory_space<vmem>>) attributes {dimension_semantics = [#tpu.dimension_semantics<parallel>], iteration_bounds = array<i64: 1>, scalar_prefetch = 1 : i64, scratch_operands = 0 : i64, tpu.core_type = #tpu.core_type<tc>, window_params = [{transform_indices = @transform_0, window_bounds = array<i64: 8, 2, 32>}, {transform_indices = @transform_1, window_bounds = array<i64: 8, 1, 32>}, {transform_indices = @transform_2, window_bounds = array<i64: 8, 2, 32>}]} {
    %c0 = arith.constant 0 : index
    %c0_0 = arith.constant 0 : index
    %c0_1 = arith.constant 0 : index
    %0 = vector.load %arg2[%c0, %c0_0, %c0_1] : memref<8x2x32xf32, #tpu.memory_space<vmem>>, vector<8x2x32xf32>
    %c0_2 = arith.constant 0 : index
    %c0_3 = arith.constant 0 : index
    %c0_4 = arith.constant 0 : index
    %1 = vector.load %arg3[%c0_2, %c0_3, %c0_4] : memref<8x1x32xf32, #tpu.memory_space<vmem>>, vector<8x1x32xf32>
    %2 = vector.broadcast %1 : vector<8x1x32xf32> to vector<8x2x32xf32>
    %3 = arith.addf %0, %2 : vector<8x2x32xf32>
    %c0_5 = arith.constant 0 : index
    %c0_6 = arith.constant 0 : index
    %c0_7 = arith.constant 0 : index
    %4 = vector.load %arg4[%c0_5, %c0_6, %c0_7] : memref<8x2x32xf32, #tpu.memory_space<vmem>>, vector<8x2x32xf32>
    tpu.vector_store %arg4[%c0_5, %c0_6, %c0_7], %3 {strides = array<i32>} : memref<8x2x32xf32, #tpu.memory_space<vmem>>, vector<8x2x32xf32>,
    return
  }
  func.func @transform_0(%arg0: i32, %arg1: memref<1xi32, #tpu.memory_space<smem>>) -> (i32, i32, i32) {
    %c0_i32 = arith.constant 0 : i32
    %c0_i32_0 = arith.constant 0 : i32
    %c0_i32_1 = arith.constant 0 : i32
    return %arg0, %c0_i32, %c0_i32_0 : i32, i32, i32
  }
  func.func @transform_1(%arg0: i32, %arg1: memref<1xi32, #tpu.memory_space<smem>>) -> (i32, i32, i32) {
    %c0_i32 = arith.constant 0 : i32
    %c0_i32_0 = arith.constant 0 : i32
    %c0_i32_1 = arith.constant 0 : i32
    return %arg0, %c0_i32, %c0_i32_0 : i32, i32, i32
  }
  func.func @transform_2(%arg0: i32, %arg1: memref<1xi32, #tpu.memory_space<smem>>) -> (i32, i32, i32) {
    %c0_i32 = arith.constant 0 : i32
    %c0_i32_0 = arith.constant 0 : i32
    %c0_i32_1 = arith.constant 0 : i32
    return %arg0, %c0_i32, %c0_i32_0 : i32, i32, i32
  }
}

</mosaic_0001>

<llo_original>
// kernel: tpu_custom_call.1
$region0: #{tpu_custom_call.1}
  #allocation0 [shape = 'u32[]', space=smem, size = 0x4, offset = 0x4, fixed_abs, tag = 'smem constant byte address 0x4 - core index']
  #allocation1 [shape = 'u32[144,128]{1,0:T(1,128)}', space=vmem, size = 0x12000, scoped, tag = 'internal scratch']
  #allocation2 [shape = 's32[1]{0}', space=sflag, size = 0x4, scoped, tag = 'scoped memory for tpu_custom_call.1']
  #allocation3 [shape = 's32[1]{0:T(128)S(6)}', space=smem, size = 0x200, scoped, tag = 'prefetched SMEM operand 0']
  %s0 = inlined_call_operand.<no memory space> [shape: s32[1], index: 0, kind: input, shape index: {}]
  %s1 = inlined_call_operand.hbm [shape: f32[8,2,32], index: 1, kind: input, shape index: {}]
  %s2 = inlined_call_operand.hbm [shape: f32[8,1,32], index: 2, kind: input, shape index: {}]
  %s3 = inlined_call_operand.hbm [shape: f32[8,2,32], index: 3, kind: output, shape index: {}]
  %s4 = sld [smem:[#allocation0]]
  $region26: #{tpu_custom_call.1} parent=0
    _
  %s6 = ssub.s32 1, %s4
  %s7 = scalar_select 0, %s6, %s4
  %8 = sst [smem:[#allocation3]] %s0
  $region1: #{tpu_custom_call.1} parent=0
    #allocation4 [shape = 'u8[8192]{0}', space=vmem, size = 0x2000, scoped, tag = 'input window, operand 1, single buffered']
    #allocation5 [shape = 's32[1]{0}', space=sflag, size = 0x4, scoped, tag = 'scoped memory for tpu_custom_call.1']
    #allocation6 [shape = 's32[1]{0}', space=sflag, size = 0x4, scoped, tag = 'scoped memory for tpu_custom_call.1']
    #allocation7 [shape = 'u8[4096]{0}', space=vmem, size = 0x1000, scoped, tag = 'input window, operand 2, single buffered']
    #allocation8 [shape = 's32[1]{0}', space=sflag, size = 0x4, scoped, tag = 'scoped memory for tpu_custom_call.1']
    #allocation9 [shape = 'u8[8192]{0}', space=vmem, size = 0x2000, scoped, tag = 'output window, operand 0, single buffered']
    %9 = vsyncpa [#allocation5], 0
    %10 = vsyncpa [#allocation8], 0
    %11 = vsyncpa [#allocation6], 0
    // Predicated region
    $region2: #{tpu_custom_call.1} parent=1 // pred_check
      _
    $region3: #{tpu_custom_call.1} parent=1 // pred_check_branch
      %13 = sbr.rel (0) target = $region5
    $region4: #{tpu_custom_call.1} parent=1 // pred_region
      %s15 = ssub.s32 256, 256
      %16 = vsyncadd [#allocation5], %s15
      %s17 = sshll.u32 [#allocation4], 4
      %s18 = int_to_ptr.vmem [resolvable:$true] %s17
      %23 = dma.hbm_to_vmem [thread:$0]  %s1, 256, %s18, [#allocation5], 32, 32, 2
    $region5: #{tpu_custom_call.1} parent=1 // pred_fallthru
      _
    // Predicated region
    $region6: #{tpu_custom_call.1} parent=1 // pred_check
      _
    $region7: #{tpu_custom_call.1} parent=1 // pred_check_branch
      %25 = sbr.rel (0) target = $region9
    $region8: #{tpu_custom_call.1} parent=1 // pred_region
      %s27 = ssub.s32 128, 128
      %28 = vsyncadd [#allocation8], %s27
      %s29 = sshll.u32 [#allocation7], 4
      %s30 = int_to_ptr.vmem [resolvable:$true] %s29
      %35 = dma.hbm_to_vmem [thread:$0]  %s2, 128, %s30, [#allocation8], 16, 16, 1
    $region9: #{tpu_custom_call.1} parent=1 // pred_fallthru
      _
    // Predicated region
    $region10: #{tpu_custom_call.1} parent=1 // pred_check
      _
    $region11: #{tpu_custom_call.1} parent=1 // pred_check_branch
      %37 = sbr.rel (0) target = $region13
    $region12: #{tpu_custom_call.1} parent=1 // pred_region
      %38 = dma.done [#allocation5], 256
    $region13: #{tpu_custom_call.1} parent=1 // pred_fallthru
      _
    // Predicated region
    $region14: #{tpu_custom_call.1} parent=1 // pred_check
      _
    $region15: #{tpu_custom_call.1} parent=1 // pred_check_branch
      %40 = sbr.rel (0) target = $region17
    $region16: #{tpu_custom_call.1} parent=1 // pred_region
      %41 = dma.done [#allocation8], 128
    $region17: #{tpu_custom_call.1} parent=1 // pred_fallthru
      _
    %v42 = vld [vmem:[#allocation4] sm:$0x3]
    %v43 = vld [vmem:[#allocation4 + $0x2] sm:$0x3]
    %v44 = vld [vmem:[#allocation4 + $0x4] sm:$0x3]
    %v45 = vld [vmem:[#allocation4 + $0x6] sm:$0x3]
    %v46 = vld [vmem:[#allocation4 + $0x8] sm:$0x3]
    %v47 = vld [vmem:[#allocation4 + $0xa] sm:$0x3]
    %v48 = vld [vmem:[#allocation4 + $0xc] sm:$0x3]
    %v49 = vld [vmem:[#allocation4 + $0xe] sm:$0x3]
    %v50 = vld [vmem:[#allocation7] sm:$0x1]
    %v51 = vld [vmem:[#allocation7 + $0x1] sm:$0x1]
    %v52 = vld [vmem:[#allocation7 + $0x2] sm:$0x1]
    %v53 = vld [vmem:[#allocation7 + $0x3] sm:$0x1]
    %v54 = vld [vmem:[#allocation7 + $0x4] sm:$0x1]
    %v55 = vld [vmem:[#allocation7 + $0x5] sm:$0x1]
    %v56 = vld [vmem:[#allocation7 + $0x6] sm:$0x1]
    %v57 = vld [vmem:[#allocation7 + $0x7] sm:$0x1]
    %v66 = vlaneseq
    %v67 = vshrl.u32 %v66, 7
    %v68 = vsub.s32 0, %v67
    %v69 = vrot.slane %v50, %v68
    %v70 = vlaneseq
    %v71 = vshrl.u32 %v70, 7
    %v72 = vsub.s32 0, %v71
    %v73 = vrot.slane %v51, %v72
    %v74 = vlaneseq
    %v75 = vshrl.u32 %v74, 7
    %v76 = vsub.s32 0, %v75
    %v77 = vrot.slane %v52, %v76
    %v78 = vlaneseq
    %v79 = vshrl.u32 %v78, 7
    %v80 = vsub.s32 0, %v79
    %v81 = vrot.slane %v53, %v80
    %v82 = vlaneseq
    %v83 = vshrl.u32 %v82, 7
    %v84 = vsub.s32 0, %v83
    %v85 = vrot.slane %v54, %v84
    %v86 = vlaneseq
    %v87 = vshrl.u32 %v86, 7
    %v88 = vsub.s32 0, %v87
    %v89 = vrot.slane %v55, %v88
    %v90 = vlaneseq
    %v91 = vshrl.u32 %v90, 7
    %v92 = vsub.s32 0, %v91
    %v93 = vrot.slane %v56, %v92
    %v94 = vlaneseq
    %v95 = vshrl.u32 %v94, 7
    %v96 = vsub.s32 0, %v95
    %v97 = vrot.slane %v57, %v96
    %v106 = vadd.f32 %v42, %v69
    %v107 = vadd.f32 %v43, %v73
    %v108 = vadd.f32 %v44, %v77
    %v109 = vadd.f32 %v45, %v81
    %v110 = vadd.f32 %v46, %v85
    %v111 = vadd.f32 %v47, %v89
    %v112 = vadd.f32 %v48, %v93
    %v113 = vadd.f32 %v49, %v97
    %vm114 = vcmask 254976
    %115 = vst.msk [vmem:[#allocation9] sm:$0x3] %vm114, %v106
    %116 = vst.msk [vmem:[#allocation9 + $0x2] sm:$0x3] %vm114, %v107
    %117 = vst.msk [vmem:[#allocation9 + $0x4] sm:$0x3] %vm114, %v108
    %118 = vst.msk [vmem:[#allocation9 + $0x6] sm:$0x3] %vm114, %v109
    %119 = vst.msk [vmem:[#allocation9 + $0x8] sm:$0x3] %vm114, %v110
    %120 = vst.msk [vmem:[#allocation9 + $0xa] sm:$0x3] %vm114, %v111
    %121 = vst.msk [vmem:[#allocation9 + $0xc] sm:$0x3] %vm114, %v112
    %122 = vst.msk [vmem:[#allocation9 + $0xe] sm:$0x3] %vm114, %v113
    // Predicated region
    $region18: #{tpu_custom_call.1} parent=1 // pred_check
      _
    $region19: #{tpu_custom_call.1} parent=1 // pred_check_branch
      %124 = sbr.rel (0) target = $region21
    $region20: #{tpu_custom_call.1} parent=1 // pred_region
      %s126 = ssub.s32 256, 256
      %127 = vsyncadd [#allocation6], %s126
      %s128 = sshll.u32 [#allocation9], 4
      %s129 = int_to_ptr.vmem [resolvable:$true] %s128
      %134 = dma.vmem_to_hbm [thread:$0]  %s129, 256, %s3, [#allocation6], 32, 32, 2
    $region21: #{tpu_custom_call.1} parent=1 // pred_fallthru
      _
    // Predicated region
    $region22: #{tpu_custom_call.1} parent=1 // pred_check
      _
    $region23: #{tpu_custom_call.1} parent=1 // pred_check_branch
      %136 = sbr.rel (0) target = $region25
    $region24: #{tpu_custom_call.1} parent=1 // pred_region
      %137 = dma.done [#allocation6], 256
    $region25: #{tpu_custom_call.1} parent=1 // pred_fallthru
      _
    %138 = vsyncpa [#allocation5], 1
    %139 = vsyncpa [#allocation8], 1
    %140 = vsyncpa [#allocation6], 1

</llo_original>
